<compile_context>
chip_gen: v7x
topology: tpu7x:2x2x1
jax: 0.10.0
libtpu: 0.0.40
codegen_flags: <defaults>
</compile_context>

<pallas_src>
import jax
import jax.numpy as jnp
from jax.experimental import pallas as pl
from jax.experimental.pallas import tpu as pltpu


def _round_up(a, b):
    return -(-a // b) * b


def _conv_bn_relu_kernel(x_ref, w_ref, b_ref, o_ref):
    # x_ref: (1, 1, THW, KKC)    bf16  im2col activation tile (contiguous view)
    # w_ref: (TCout, KKC)        bf16  conv weights with BN scale folded in
    # b_ref: (TCout, 1)          f32   folded conv-bias + BN shift
    # o_ref: (1, 1, TCout, THW)  bf16  channel-major output tile (lane-dense store)
    acc = jax.lax.dot_general(                           # single deep MXU matmul
        w_ref[...], x_ref[0, 0],
        dimension_numbers=(((1,), (1,)), ((), ())),       # contract K*K*Cin
        preferred_element_type=jnp.float32)               # (TCout, THW) f32
    out = jnp.maximum(acc + b_ref[...], 0.0)              # BN shift + ReLU (f32)
    o_ref[0, 0] = out.astype(o_ref.dtype)                 # bf16, THW lanes (dense vst)


def _device_vmem_bytes():
    try:
        return int(pltpu.get_tpu_info().vmem_capacity_bytes)
    except Exception:
        return 64 * 1024 * 1024        # conservative default (v7x-sized VMEM)


def conv2d_block_forward(x_nchw, conv_w, conv_b, bn_gamma, bn_beta,
                         bn_mean, bn_var, *, kernel_size=3, eps=1e-5,
                         block_rows=None):
    """Eval-mode Conv2DBlock forward: Conv2d(k, s=1, p=(k-1)//2) + BN + ReLU (+Dropout=id).

    x_nchw: (N, Cin, H, W) f32; conv_w: (Cout, Cin, K, K); conv_b / bn_*: (Cout,)
    Returns (N, Cout, H, W) f32.
    """
    N, Cin, H, W = x_nchw.shape
    Cout = conv_w.shape[0]
    K = kernel_size
    pad = (K - 1) // 2
    KKC = K * K * Cin

    # ---- Cout tiling: no padded-channel writeback for Cout <= 256 ----
    if Cout <= 256:
        TCout, Cout_p = Cout, Cout
    else:
        TCout = 256                                   # 256-wide tiles (v6e/v7x MXU)
        Cout_p = _round_up(Cout, TCout)
    nC = Cout_p // TCout

    # ---- generation-aware row tile / VMEM sizing ----
    dev_vmem = _device_vmem_bytes()
    vmem_cap = (96 << 20) if dev_vmem >= (100 << 20) else (48 << 20)
    if block_rows is None:
        budget = min(dev_vmem // 4, 32 << 20)
        per_row = W * (2 * 2 * _round_up(KKC, 128)        # x tile (bf16, 2-buf, lane pad)
                       + TCout * (2 * 2 + 2 * 4))         # out bf16 2-buf + f32 acc temps
        TH = max(1, min(H, budget // max(per_row, 1), 512))
        if TH >= 8:
            TH -= TH % 8
    else:
        TH = max(1, min(block_rows, H))
    nH = -(-H // TH)
    H_pad = nH * TH
    THW = TH * W

    # ---- activation: NHWC bf16, zero-pad, full im2col into the lane axis ----
    # xu[n, h, w, (kh*K+kw)*Cin + c] = x[n, c, h+kh-pad, w+kw-pad]
    x_nhwc = jnp.transpose(x_nchw, (0, 2, 3, 1)).astype(jnp.bfloat16)
    xp = jnp.pad(x_nhwc, ((0, 0), (pad, pad), (pad, pad), (0, 0)))
    taps = [xp[:, kh:kh + H, kw:kw + W, :] for kh in range(K) for kw in range(K)]
    xu = jnp.concatenate(taps, axis=-1)               # (N, H, W, KKC)
    if H_pad > H:
        xu = jnp.pad(xu, ((0, 0), (0, H_pad - H), (0, 0), (0, 0)))
    xu = xu.reshape(N, nH, THW, KKC)                  # contiguous reshape (free)

    # ---- weights / folded BatchNorm (scale into weights, shift into bias) ----
    scale = bn_gamma / jnp.sqrt(bn_var + eps)                        # (Cout,)
    bias = (conv_b - bn_mean) * scale + bn_beta                      # (Cout,)
    w_t = jnp.transpose(conv_w, (2, 3, 1, 0)).reshape(KKC, Cout)     # (KKC, Cout)
    w_t = (w_t * scale[None, :]).T                                   # (Cout, KKC)
    if Cout_p > Cout:
        w_t = jnp.pad(w_t, ((0, Cout_p - Cout), (0, 0)))
        bias = jnp.pad(bias, (0, Cout_p - Cout))
    w_t = w_t.astype(jnp.bfloat16)
    bias = bias.reshape(Cout_p, 1).astype(jnp.float32)

    # ---- explicit VMEM budget: lane padding + f32 acc + double buffering ----
    x_tile = _round_up(THW, 16) * _round_up(KKC, 128) * 2
    w_tile = _round_up(TCout, 16) * _round_up(KKC, 128) * 2
    o_tile = _round_up(TCout, 16) * _round_up(THW, 128) * 2
    b_tile = _round_up(TCout, 8) * 128 * 4
    acc_tmp = _round_up(TCout, 8) * _round_up(THW, 128) * 4 * 2
    block_bytes = 2 * (x_tile + w_tile + o_tile + b_tile) + acc_tmp
    vmem_limit = int(min(max(block_bytes * 1.3 + (4 << 20), 16 << 20), vmem_cap))

    out_p = pl.pallas_call(
        _conv_bn_relu_kernel,
        out_shape=jax.ShapeDtypeStruct((N, nH, Cout_p, THW), jnp.bfloat16),
        grid_spec=pltpu.PrefetchScalarGridSpec(
            num_scalar_prefetch=0,
            grid=(N, nH, nC),                        # Cout innermost: x tile resident
            in_specs=[
                pl.BlockSpec((1, 1, THW, KKC), lambda n, i, j: (n, i, 0, 0)),
                pl.BlockSpec((TCout, KKC), lambda n, i, j: (j, 0)),
                pl.BlockSpec((TCout, 1), lambda n, i, j: (j, 0)),
            ],
            out_specs=pl.BlockSpec((1, 1, TCout, THW), lambda n, i, j: (n, i, j, 0)),
        ),
        compiler_params=pltpu.CompilerParams(
            dimension_semantics=("parallel", "parallel", "arbitrary"),
            vmem_limit_bytes=vmem_limit),
    )(xu, w_t, bias)

    # channel-major tiles -> NCHW, drop row padding / padded channels, back to f32.
    out = out_p.reshape(N, nH, Cout_p, TH, W)
    out = jnp.transpose(out, (0, 2, 1, 3, 4)).reshape(N, Cout_p, H_pad, W)
    return out[:, :Cout, :H, :].astype(jnp.float32)


def _reference(x_nchw, conv_w, conv_b, bn_gamma, bn_beta, bn_mean, bn_var,
               *, kernel_size=3, eps=1e-5):
    pad = (kernel_size - 1) // 2
    y = jax.lax.conv_general_dilated(
        x_nchw, conv_w, window_strides=(1, 1),
        padding=((pad, pad), (pad, pad)),
        dimension_numbers=("NCHW", "OIHW", "NCHW"))
    y = y + conv_b[None, :, None, None]
    y = (y - bn_mean[None, :, None, None]) / jnp.sqrt(bn_var + eps)[None, :, None, None]
    y = y * bn_gamma[None, :, None, None] + bn_beta[None, :, None, None]
    return jnp.maximum(y, 0.0)


if __name__ == "__main__":
    key = jax.random.PRNGKey(0)
    N, Cin, Cout, H, W, K = 2, 4, 8, 16, 16, 3

    k0, k1, k2, k3, k4, k5, k6 = jax.random.split(key, 7)
    x = jax.random.normal(k0, (N, Cin, H, W), dtype=jnp.float32)
    conv_w = jax.random.normal(k1, (Cout, Cin, K, K), dtype=jnp.float32) * 0.1
    conv_b = jax.random.normal(k2, (Cout,), dtype=jnp.float32) * 0.1
    bn_gamma = 1.0 + 0.1 * jax.random.normal(k3, (Cout,), dtype=jnp.float32)
    bn_beta = 0.1 * jax.random.normal(k4, (Cout,), dtype=jnp.float32)
    bn_mean = 0.1 * jax.random.normal(k5, (Cout,), dtype=jnp.float32)
    bn_var = jnp.abs(1.0 + 0.1 * jax.random.normal(k6, (Cout,), dtype=jnp.float32))

    # block_rows=8 -> 2 row tiles per image: exercises the spatial-tiling path.
    out = conv2d_block_forward(x, conv_w, conv_b, bn_gamma, bn_beta,
                               bn_mean, bn_var, kernel_size=K, block_rows=8)
    out = jax.block_until_ready(out)

    ref = _reference(x, conv_w, conv_b, bn_gamma, bn_beta, bn_mean, bn_var,
                     kernel_size=K)
    assert out.shape == (N, Cout, H, W)
    # bf16 matmul operands / bf16 output store, f32 accumulation -> loose tolerance.
    err = float(jnp.max(jnp.abs(out - ref)))
    assert jnp.allclose(out, ref, atol=5e-2, rtol=5e-2), f"max err {err}"
    print("KERNEL_OK")
</pallas_src>

<mosaic_0001>
module attributes {stable_mosaic.version = 11 : i64} {
  func.func @_conv_bn_relu_kernel(%arg0: i32, %arg1: i32, %arg2: i32, %arg3: memref<1x1x128x36xbf16, #tpu.memory_space<vmem>>, %arg4: memref<8x36xbf16, #tpu.memory_space<vmem>>, %arg5: memref<8x1xf32, #tpu.memory_space<vmem>>, %arg6: memref<1x1x8x128xbf16, #tpu.memory_space<vmem>>) attributes {dimension_semantics = [#tpu.dimension_semantics<parallel>, #tpu.dimension_semantics<parallel>, #tpu.dimension_semantics<arbitrary>], iteration_bounds = array<i64: 2, 2, 1>, scalar_prefetch = 0 : i64, scratch_operands = 0 : i64, tpu.core_type = #tpu.core_type<tc>, window_params = [{transform_indices = @transform_0, window_bounds = array<i64: 1, 1, 128, 36>}, {transform_indices = @transform_1, window_bounds = array<i64: 8, 36>}, {transform_indices = @transform_2, window_bounds = array<i64: 8, 1>}, {transform_indices = @transform_3, window_bounds = array<i64: 1, 1, 8, 128>}]} {
    %c0 = arith.constant 0 : index
    %c0_0 = arith.constant 0 : index
    %0 = vector.load %arg4[%c0, %c0_0] : memref<8x36xbf16, #tpu.memory_space<vmem>>, vector<8x36xbf16>
    %c0_1 = arith.constant 0 : index
    %c0_2 = arith.constant 0 : index
    %c0_3 = arith.constant 0 : index
    %c0_4 = arith.constant 0 : index
    %1 = vector.load %arg3[%c0_1, %c0_2, %c0_3, %c0_4] : memref<1x1x128x36xbf16, #tpu.memory_space<vmem>>, vector<1x1x128x36xbf16>
    %2 = vector.shape_cast %1 : vector<1x1x128x36xbf16> to vector<128x36xbf16>
    %cst = arith.constant dense<0.000000e+00> : vector<8x128xf32>
    %3 = tpu.matmul %0, %2, %cst {dimension_numbers = #tpu.dot_dimension_numbers<[1], [1], [0], [0], [0, 0, 1, 0], [], []>} : vector<8x36xbf16>, vector<128x36xbf16>, vector<8x128xf32> -> vector<8x128xf32>
    %c0_5 = arith.constant 0 : index
    %c0_6 = arith.constant 0 : index
    %4 = vector.load %arg5[%c0_5, %c0_6] : memref<8x1xf32, #tpu.memory_space<vmem>>, vector<8x1xf32>
    %5 = vector.broadcast %4 : vector<8x1xf32> to vector<8x128xf32>
    %6 = arith.addf %3, %5 : vector<8x128xf32>
    %cst_7 = arith.constant 0.000000e+00 : f32
    %7 = vector.broadcast %cst_7 : f32 to vector<8x128xf32>
    %8 = arith.maximumf %6, %7 : vector<8x128xf32>
    %9 = arith.truncf %8 : vector<8x128xf32> to vector<8x128xbf16>
    %c0_8 = arith.constant 0 : index
    %c0_9 = arith.constant 0 : index
    %c0_10 = arith.constant 0 : index
    %c0_11 = arith.constant 0 : index
    %10 = vector.load %arg6[%c0_8, %c0_9, %c0_10, %c0_11] : memref<1x1x8x128xbf16, #tpu.memory_space<vmem>>, vector<1x1x8x128xbf16>
    %11 = vector.shape_cast %10 : vector<1x1x8x128xbf16> to vector<8x128xbf16>
    %12 = vector.shape_cast %9 : vector<8x128xbf16> to vector<1x1x8x128xbf16>
    tpu.vector_store %arg6[%c0_8, %c0_9, %c0_10, %c0_11], %12 {strides = array<i32>} : memref<1x1x8x128xbf16, #tpu.memory_space<vmem>>, vector<1x1x8x128xbf16>,
    return
  }
  func.func @transform_0(%arg0: i32, %arg1: i32, %arg2: i32) -> (i32, i32, i32, i32) {
    %c0_i32 = arith.constant 0 : i32
    %c0_i32_0 = arith.constant 0 : i32
    %c0_i32_1 = arith.constant 0 : i32
    return %arg0, %arg1, %c0_i32, %c0_i32_0 : i32, i32, i32, i32
  }
  func.func @transform_1(%arg0: i32, %arg1: i32, %arg2: i32) -> (i32, i32) {
    %c0_i32 = arith.constant 0 : i32
    %c0_i32_0 = arith.constant 0 : i32
    return %arg2, %c0_i32 : i32, i32
  }
  func.func @transform_2(%arg0: i32, %arg1: i32, %arg2: i32) -> (i32, i32) {
    %c0_i32 = arith.constant 0 : i32
    %c0_i32_0 = arith.constant 0 : i32
    return %arg2, %c0_i32 : i32, i32
  }
  func.func @transform_3(%arg0: i32, %arg1: i32, %arg2: i32) -> (i32, i32, i32, i32) {
    %c0_i32 = arith.constant 0 : i32
    %c0_i32_0 = arith.constant 0 : i32
    return %arg0, %arg1, %arg2, %c0_i32 : i32, i32, i32, i32
  }
}

</mosaic_0001>

<llo_original>
// kernel: tpu_custom_call.1
$region0: #{tpu_custom_call.1}
  #allocation0 [shape = 'u32[]', space=smem, size = 0x4, offset = 0x4, fixed_abs, tag = 'smem constant byte address 0x4 - core index']
  #allocation1 [shape = 'u32[144,128]{1,0:T(1,128)}', space=vmem, size = 0x12000, scoped, tag = 'internal scratch']
  %s0 = inlined_call_operand.vmem [shape: bf16[2,2,128,36], index: 0, kind: input, shape index: {}]
  %s1 = inlined_call_operand.vmem [shape: bf16[8,36], index: 1, kind: input, shape index: {}]
  %s2 = inlined_call_operand.vmem [shape: f32[8,1], index: 2, kind: input, shape index: {}]
  %s3 = inlined_call_operand.hbm [shape: bf16[2,2,8,128], index: 3, kind: output, shape index: {}]
  %s4 = sld [smem:[#allocation0]]
  $region45: #{tpu_custom_call.1} parent=0
    _
  %s6 = ssub.s32 1, %s4
  %s7 = scalar_select 0, %s6, %s4
  $region1: #{tpu_custom_call.1} parent=0
    #allocation2 [shape = 'u8[4096]{0}', space=vmem, size = 0x1000, scoped, tag = 'output window, operand 0']
    #allocation3 [shape = 's32[2]{0}', space=sflag, size = 0x8, scoped, tag = 'scoped memory for tpu_custom_call.1']
    %8 = vsyncpa [#allocation3], 0
    %s9 = scalar_lea.sflag [#allocation3], 1
    %10 = vsyncpa %s9, 0
    loop: start=0, step=1, limit=6
    $region2: #{tpu_custom_call.1} parent=1 // loop_pre_header
      _
    $region3: #{tpu_custom_call.1} parent=1 // loop_header
      %s12 = sphi 0, %s16
      %p13 = scmp.ge.s32.totalorder %s12, 6
      %s19 = sphi 0, %s38
      %s20 = sphi 0, %s34
      %s21 = sphi 0, %s30
      %s22 = sphi 0, %s19
      %s23 = sphi 0, %s20
      %s24 = sphi 0, %s21
      %s25 = sphi 0, %s22
      %s26 = sphi 0, %s23
      %s27 = sphi 0, %s24
      %s43 = sphi 0, %s45
      %s46 = sphi 0, %s43
      %s47 = sphi 0, %s46
      %s63 = sphi 0, %s47
      %s69 = sphi 0, %s71
      %s72 = sphi 0, %s69
      %s73 = sphi 0, %s72
      %s89 = sphi 0, %s73
      %s95 = sphi 0, %s97
      %s98 = sphi 0, %s95
      %s99 = sphi 0, %s98
      %s115 = sphi 0, %s99
      %s125 = sphi 0, %s127
      %s128 = sphi 0, %s125
      %s129 = sphi 0, %s128
      %s145 = sphi 0, %s129
    $region4: #{tpu_custom_call.1} parent=1 // loop_header_branch
      %15 = sbr.rel (%p13) target = $region8
    $region5: #{tpu_custom_call.1} parent=1 // loop_body
      %s17 = ssub.s32 %s12, 1
      %s18 = ssub.s32 %s12, 2
      %s28 = sadd.s32 1, %s21
      %p29 = scmp.ge.s32.totalorder %s28, 1
      %s30 = scalar_select %p29, 0, %s28
      %s31 = sadd.s32 1, %s20
      %s32 = scalar_select %p29, %s31, %s20
      %p33 = scmp.ge.s32.totalorder %s32, 2
      %s34 = scalar_select %p33, 0, %s32
      %s35 = sadd.s32 1, %s19
      %s36 = scalar_select %p33, %s35, %s19
      %p37 = scmp.ge.s32.totalorder %s36, 2
      %s38 = scalar_select %p37, 0, %s36
      %s39 = ssub.s32 %s19, %s38
      %s40 = ssub.s32 %s20, %s34
      %s41 = sor.u32 %s39, %s40
      %p42 = scmp.eq.s32.totalorder %s41, 0
      %s44 = sadd.s32 %s43, 1
      %s45 = scalar_select %p42, %s43, %s44
      %p48 = pneg %p42
      %p49 = scmp.eq.s32.totalorder %s12, 3
      %p50 = por %p48, %p49
      %p51 = scmp.ne.s32.totalorder %s43, %s46
      %p52 = scmp.eq.s32.totalorder %s12, 0
      %p53 = por %p51, %p52
      %p54 = scmp.ne.s32.totalorder %s43, %s46
      %p55 = scmp.eq.s32.totalorder %s17, 3
      %p56 = por %p54, %p55
      %p57 = scmp.ne.s32.totalorder %s46, %s47
      %p58 = scmp.eq.s32.totalorder %s17, 0
      %p59 = por %p57, %p58
      %p60 = scmp.ne.s32.totalorder %s46, %s47
      %p61 = scmp.eq.s32.totalorder %s18, 3
      %p62 = por %p60, %p61
      %p64 = scmp.ne.s32.totalorder %s47, %s63
      %p65 = scmp.eq.s32.totalorder %s18, 0
      %p66 = por %p64, %p65
      %s67 = ssub.s32 %s21, %s30
      %p68 = scmp.eq.s32.totalorder %s67, 0
      %s70 = sadd.s32 %s69, 1
      %s71 = scalar_select %p68, %s69, %s70
      %p74 = pneg %p68
      %p75 = scmp.eq.s32.totalorder %s12, 3
      %p76 = por %p74, %p75
      %p77 = scmp.ne.s32.totalorder %s69, %s72
      %p78 = scmp.eq.s32.totalorder %s12, 0
      %p79 = por %p77, %p78
      %p80 = scmp.ne.s32.totalorder %s69, %s72
      %p81 = scmp.eq.s32.totalorder %s17, 3
      %p82 = por %p80, %p81
      %p83 = scmp.ne.s32.totalorder %s72, %s73
      %p84 = scmp.eq.s32.totalorder %s17, 0
      %p85 = por %p83, %p84
      %p86 = scmp.ne.s32.totalorder %s72, %s73
      %p87 = scmp.eq.s32.totalorder %s18, 3
      %p88 = por %p86, %p87
      %p90 = scmp.ne.s32.totalorder %s73, %s89
      %p91 = scmp.eq.s32.totalorder %s18, 0
      %p92 = por %p90, %p91
      %s93 = ssub.s32 %s21, %s30
      %p94 = scmp.eq.s32.totalorder %s93, 0
      %s96 = sadd.s32 %s95, 1
      %s97 = scalar_select %p94, %s95, %s96
      %p100 = pneg %p94
      %p101 = scmp.eq.s32.totalorder %s12, 3
      %p102 = por %p100, %p101
      %p103 = scmp.ne.s32.totalorder %s95, %s98
      %p104 = scmp.eq.s32.totalorder %s12, 0
      %p105 = por %p103, %p104
      %p106 = scmp.ne.s32.totalorder %s95, %s98
      %p107 = scmp.eq.s32.totalorder %s17, 3
      %p108 = por %p106, %p107
      %p109 = scmp.ne.s32.totalorder %s98, %s99
      %p110 = scmp.eq.s32.totalorder %s17, 0
      %p111 = por %p109, %p110
      %p112 = scmp.ne.s32.totalorder %s98, %s99
      %p113 = scmp.eq.s32.totalorder %s18, 3
      %p114 = por %p112, %p113
      %p116 = scmp.ne.s32.totalorder %s99, %s115
      %p117 = scmp.eq.s32.totalorder %s18, 0
      %p118 = por %p116, %p117
      %s119 = ssub.s32 %s19, %s38
      %s120 = ssub.s32 %s20, %s34
      %s121 = sor.u32 %s119, %s120
      %s122 = ssub.s32 %s21, %s30
      %s123 = sor.u32 %s121, %s122
      %p124 = scmp.eq.s32.totalorder %s123, 0
      %s126 = sadd.s32 %s125, 1
      %s127 = scalar_select %p124, %s125, %s126
      %p130 = pneg %p124
      %p131 = scmp.eq.s32.totalorder %s12, 3
      %p132 = por %p130, %p131
      %p133 = scmp.ne.s32.totalorder %s125, %s128
      %p134 = scmp.eq.s32.totalorder %s12, 0
      %p135 = por %p133, %p134
      %p136 = scmp.ne.s32.totalorder %s125, %s128
      %p137 = scmp.eq.s32.totalorder %s17, 3
      %p138 = por %p136, %p137
      %p139 = scmp.ne.s32.totalorder %s128, %s129
      %p140 = scmp.eq.s32.totalorder %s17, 0
      %p141 = por %p139, %p140
      %p142 = scmp.ne.s32.totalorder %s128, %s129
      %p143 = scmp.eq.s32.totalorder %s18, 3
      %p144 = por %p142, %p143
      %p146 = scmp.ne.s32.totalorder %s129, %s145
      %p147 = scmp.eq.s32.totalorder %s18, 0
      %p148 = por %p146, %p147
      %p149 = scmp.le.s32.totalorder 1, %s12
      %p150 = scmp.lt.s32.totalorder %s12, 5
      %p151 = pnand %p149, %p150
      %p152 = pneg %p151
      // Predicated region
      $region9: #{tpu_custom_call.1} parent=5 // pred_check
        _
      $region10: #{tpu_custom_call.1} parent=5 // pred_check_branch
        %154 = sbr.rel (%p151) target = $region12
      $region11: #{tpu_custom_call.1} parent=5 // pred_region
        %s155 = ssub.s32 %s12, 1
        // Predicated region
        $region13: #{tpu_custom_call.1} parent=11 // pred_check
          %p156 = pneg %p85
        $region14: #{tpu_custom_call.1} parent=11 // pred_check_branch
          %158 = sbr.rel (%p156) target = $region16
        $region15: #{tpu_custom_call.1} parent=11 // pred_region
          %p159 = scmp.lt.s32.totalorder %s24, 0
          %s160 = scalar_select %p159, %s24, 0
          %s161 = smul.addr %s160, 4
          %s162 = scalar_lea.vmem %s1, %s161
        $region16: #{tpu_custom_call.1} parent=11 // pred_fallthru
          _
        // Predicated region
        $region17: #{tpu_custom_call.1} parent=11 // pred_check
          %p163 = pneg %p111
        $region18: #{tpu_custom_call.1} parent=11 // pred_check_branch
          %165 = sbr.rel (%p163) target = $region20
        $region19: #{tpu_custom_call.1} parent=11 // pred_region
          %p166 = scmp.lt.s32.totalorder %s24, 0
          %s167 = scalar_select %p166, %s24, 0
          %s168 = smul.addr %s167, 8
          %s169 = scalar_lea.vmem %s2, %s168
        $region20: #{tpu_custom_call.1} parent=11 // pred_fallthru
          _
      $region12: #{tpu_custom_call.1} parent=5 // pred_fallthru
        _
      %p170 = scmp.lt.s32.totalorder %s12, 4
      // Predicated region
      $region21: #{tpu_custom_call.1} parent=5 // pred_check
        %p171 = pneg %p170
      $region22: #{tpu_custom_call.1} parent=5 // pred_check_branch
        %173 = sbr.rel (%p171) target = $region24
      $region23: #{tpu_custom_call.1} parent=5 // pred_region
        // Predicated region
        $region25: #{tpu_custom_call.1} parent=23 // pred_check
          %p174 = pneg %p53
        $region26: #{tpu_custom_call.1} parent=23 // pred_check_branch
          %176 = sbr.rel (%p174) target = $region28
        $region27: #{tpu_custom_call.1} parent=23 // pred_region
          %p177 = scmp.lt.s32.totalorder %s19, 1
          %s178 = scalar_select %p177, %s19, 1
          %p179 = scmp.lt.s32.totalorder %s20, 1
          %s180 = scalar_select %p179, %s20, 1
          %s181 = smul.addr %s180, 16
          %s182 = smul.addr %s178, 32
          %s183 = sadd.s32 %s181, %s182
          %s184 = smul.addr %s183, 4
          %s185 = scalar_lea.vmem %s0, %s184
        $region28: #{tpu_custom_call.1} parent=23 // pred_fallthru
          _
      $region24: #{tpu_custom_call.1} parent=5 // pred_fallthru
        _
      %p186 = scmp.le.s32.totalorder 1, %s12
      %p187 = scmp.lt.s32.totalorder %s12, 5
      %p188 = pnand %p186, %p187
      %p189 = pneg %p188
      // Predicated region
      $region29: #{tpu_custom_call.1} parent=5 // pred_check
        _
      $region30: #{tpu_custom_call.1} parent=5 // pred_check_branch
        %191 = sbr.rel (%p188) target = $region32
      $region31: #{tpu_custom_call.1} parent=5 // pred_region
        %s192 = ssub.s32 %s12, 1
        %p193 = scmp.lt.s32.totalorder %s22, 1
        %s194 = scalar_select %p193, %s22, 1
        %p195 = scmp.lt.s32.totalorder %s23, 1
        %s196 = scalar_select %p195, %s23, 1
        %s197 = smul.addr %s196, 16
        %s198 = smul.addr %s194, 32
        %s199 = sadd.s32 %s197, %s198
        %s200 = smul.addr %s199, 4
        %s201 = scalar_lea.vmem %s0, %s200
        %p202 = pneg %p59
        %p203 = pneg %p56
        %p204 = scmp.lt.s32.totalorder %s24, 0
        %s205 = scalar_select %p204, %s24, 0
        %s206 = smul.addr %s205, 4
        %s207 = scalar_lea.vmem %s1, %s206
        %p208 = pneg %p85
        %p209 = pneg %p82
        %p210 = scmp.lt.s32.totalorder %s24, 0
        %s211 = scalar_select %p210, %s24, 0
        %s212 = smul.addr %s211, 8
        %s213 = scalar_lea.vmem %s2, %s212
        %p214 = pneg %p111
        %p215 = pneg %p108
        %p216 = pneg %p141
        %p217 = pneg %p138
        %s218 = sand.u32 %s128, 1
        %s219 = scalar_lea.sflag [#allocation3], %s218
        %s220 = sand.u32 %s128, 1
        %s221 = smul.addr %s220, 4
        %s222 = scalar_lea.vmem [#allocation2], %s221
        %p223 = scmp.lt.s32.totalorder %s22, 1
        %s224 = scalar_select %p223, %s22, 1
        %p225 = scmp.lt.s32.totalorder %s23, 1
        %s226 = scalar_select %p225, %s23, 1
        %s227 = smul.addr %s226, 16
        %s228 = smul.addr %s224, 32
        %s229 = sadd.s32 %s227, %s228
        %s230 = smul.addr %s229, 4
        %s231 = scalar_lea.vmem %s0, %s230
        %p232 = scmp.lt.s32.totalorder %s24, 0
        %s233 = scalar_select %p232, %s24, 0
        %s234 = smul.addr %s233, 4
        %s235 = scalar_lea.vmem %s1, %s234
        %p236 = scmp.lt.s32.totalorder %s24, 0
        %s237 = scalar_select %p236, %s24, 0
        %s238 = smul.addr %s237, 8
        %s239 = scalar_lea.vmem %s2, %s238
        %v241 = vld [vmem:[%s235] sm:$0xf]
        %v242 = vld [vmem:[%s231] sm:$0xf]
        %v243 = vld [vmem:[%s231 + $0x4] sm:$0xf]
        %v244 = vld [vmem:[%s231 + $0x8] sm:$0xf]
        %v245 = vld [vmem:[%s231 + $0xc] sm:$0xf]
        %v246 = vld [vmem:[%s231 + $0x10] sm:$0xf]
        %v247 = vld [vmem:[%s231 + $0x14] sm:$0xf]
        %v248 = vld [vmem:[%s231 + $0x18] sm:$0xf]
        %v249 = vld [vmem:[%s231 + $0x1c] sm:$0xf]
        %v250 = vld [vmem:[%s231 + $0x20] sm:$0xf]
        %v251 = vld [vmem:[%s231 + $0x24] sm:$0xf]
        %v252 = vld [vmem:[%s231 + $0x28] sm:$0xf]
        %v253 = vld [vmem:[%s231 + $0x2c] sm:$0xf]
        %v254 = vld [vmem:[%s231 + $0x30] sm:$0xf]
        %v255 = vld [vmem:[%s231 + $0x34] sm:$0xf]
        %v256 = vld [vmem:[%s231 + $0x38] sm:$0xf]
        %v257 = vld [vmem:[%s231 + $0x3c] sm:$0xf]
        %v258 = vld [vmem:[%s239] sm:$0xff]
        %260 = vset.pattern.permute.xlu0 0
        %261 = vperm.xlu0 %260, %v258
        %v262 = vpop.permute.xlu0 %261
        %v280 = vunpack.c.l.b16 %v242
        %v281 = vunpack.c.l.b16 %v243
        %v282 = vunpack.c.l.b16 %v244
        %v283 = vunpack.c.l.b16 %v245
        %v284 = vunpack.c.l.b16 %v246
        %v285 = vunpack.c.l.b16 %v247
        %v286 = vunpack.c.l.b16 %v248
        %v287 = vunpack.c.l.b16 %v249
        %v288 = vunpack.c.l.b16 %v250
        %v289 = vunpack.c.l.b16 %v251
        %v290 = vunpack.c.l.b16 %v252
        %v291 = vunpack.c.l.b16 %v253
        %v292 = vunpack.c.l.b16 %v254
        %v293 = vunpack.c.l.b16 %v255
        %v294 = vunpack.c.l.b16 %v256
        %v295 = vunpack.c.l.b16 %v257
        %v296 = vpack.c.b16 %v281, %v280
        %v297 = vpack.c.b16 %v283, %v282
        %v298 = vpack.c.b16 %v285, %v284
        %v299 = vpack.c.b16 %v287, %v286
        %v300 = vpack.c.b16 %v289, %v288
        %v301 = vpack.c.b16 %v291, %v290
        %v302 = vpack.c.b16 %v293, %v292
        %v303 = vpack.c.b16 %v295, %v294
        %vm304 = vcmask 293888
        %v306 = vsel %vm304, %v241, 0
        %v309 = vsel %vm304, %v296, 0
        %v312 = vsel %vm304, %v297, 0
        %v315 = vsel %vm304, %v298, 0
        %v318 = vsel %vm304, %v299, 0
        %v321 = vsel %vm304, %v300, 0
        %v324 = vsel %vm304, %v301, 0
        %v327 = vsel %vm304, %v302, 0
        %v330 = vsel %vm304, %v303, 0
        %332 = vmatprep.subr.bf16.mxu0 0
        %333 = vmatpush1.bf16.xpose.msra.mxu0 %v309
        %334 = vmatprep.subr.bf16.mxu0 0
        %335 = vmatpush1.bf16.xpose.msra.mxu0 %v312
        %336 = vmatprep.subr.bf16.mxu0 0
        %337 = vmatpush1.bf16.xpose.msra.mxu0 %v315
        %338 = vmatprep.subr.bf16.mxu0 0
        %339 = vmatpush1.bf16.xpose.msra.mxu0 %v318
        %340 = vmatprep.subr.bf16.mxu0 0
        %341 = vmatpush1.bf16.xpose.msra.mxu0 %v321
        %342 = vmatprep.subr.bf16.mxu0 0
        %343 = vmatpush1.bf16.xpose.msra.mxu0 %v324
        %344 = vmatprep.subr.bf16.mxu0 0
        %345 = vmatpush1.bf16.xpose.msra.mxu0 %v327
        %346 = vmatprep.subr.bf16.mxu0 0
        %347 = vmatpush1.bf16.xpose.msra.mxu0 %v330
        %348 = vmatprep.subr.bf16.mxu0 0
        %349 = vmatpush1.bf16.xpose.msra.mxu0 0
        %350 = vmatprep.subr.bf16.mxu0 0
        %351 = vmatpush1.bf16.xpose.msra.mxu0 0
        %352 = vmatprep.subr.bf16.mxu0 0
        %353 = vmatpush1.bf16.xpose.msra.mxu0 0
        %354 = vmatprep.subr.bf16.mxu0 0
        %355 = vmatpush1.bf16.xpose.msra.mxu0 0
        %356 = vmatprep.subr.bf16.mxu0 0
        %357 = vmatpush1.bf16.xpose.msra.mxu0 0
        %358 = vmatprep.subr.bf16.mxu0 0
        %359 = vmatpush1.bf16.xpose.msra.mxu0 0
        %360 = vmatprep.subr.bf16.mxu0 0
        %361 = vmatpush1.bf16.xpose.msra.mxu0 0
        %362 = vmatprep.subr.bf16.mxu0 0
        %363 = vmatpush1.bf16.xpose.msra.mxu0 0
        %364 = vmatprep.mubr.bf16.mxu0 0
        %365 = vmatmul.mubr.bf16.gmra.mrb[0].mxu0 %v306
        %v366 = vpop.f32.mrb[0].mxu0
        %v367 = vadd.f32 %v262, %v366
        %v368 = vpop.f32.mrb[0].mxu0
        %v369 = vpop.f32.mrb[0].mxu0
        %v370 = vpop.f32.mrb[0].mxu0
        %371 = vdwg.mxu0
        %v372 = vmax.f32 %v367, 0.0
        %v373 = vpack.c.bf16 %v372, %v372
        %374 = vst [vmem:[%s222] sm:$0xf] %v373
        %s375 = sand.u32 %s128, 1
        %s376 = scalar_lea.sflag [#allocation3], %s375
        %s377 = sand.u32 %s128, 1
        %s378 = smul.addr %s377, 4
        %s379 = scalar_lea.vmem [#allocation2], %s378
        // Predicated region
        $region33: #{tpu_custom_call.1} parent=31 // pred_check
          %p380 = pneg %p138
        $region34: #{tpu_custom_call.1} parent=31 // pred_check_branch
          %382 = sbr.rel (%p380) target = $region36
        $region35: #{tpu_custom_call.1} parent=31 // pred_region
          %s384 = ssub.s32 64, 64
          %385 = vsyncadd %s376, %s384
          %s386 = sadd.s32 %s24, %s23
          %s387 = smul.addr %s22, 2
          %s388 = sadd.s32 %s386, %s387
          %s389 = smul.addr %s388, 64
          %s390 = scalar_lea.hbm %s3, %s389
          %s392 = sshll.u32 %s379, 4
          %s393 = int_to_ptr.vmem [resolvable:$true] %s392
          %395 = dma.vmem_to_hbm [thread:$0]  %s393, 64, %s390, %s376
        $region36: #{tpu_custom_call.1} parent=31 // pred_fallthru
          _
      $region32: #{tpu_custom_call.1} parent=5 // pred_fallthru
        _
      %p396 = scmp.le.s32.totalorder 2, %s12
      // Predicated region
      $region37: #{tpu_custom_call.1} parent=5 // pred_check
        %p397 = pneg %p396
      $region38: #{tpu_custom_call.1} parent=5 // pred_check_branch
        %399 = sbr.rel (%p397) target = $region40
      $region39: #{tpu_custom_call.1} parent=5 // pred_region
        %s400 = ssub.s32 %s12, 2
        // Predicated region
        $region41: #{tpu_custom_call.1} parent=39 // pred_check
          %p401 = pneg %p144
        $region42: #{tpu_custom_call.1} parent=39 // pred_check_branch
          %403 = sbr.rel (%p401) target = $region44
        $region43: #{tpu_custom_call.1} parent=39 // pred_region
          %s404 = sand.u32 %s129, 1
          %s405 = scalar_lea.sflag [#allocation3], %s404
          %s406 = sand.u32 %s129, 1
          %s407 = smul.addr %s406, 4
          %s408 = scalar_lea.vmem [#allocation2], %s407
          %409 = dma.done %s405, 64
        $region44: #{tpu_custom_call.1} parent=39 // pred_fallthru
          _
      $region40: #{tpu_custom_call.1} parent=5 // pred_fallthru
        _
    $region6: #{tpu_custom_call.1} parent=1 // loop_footer
      %s16 = sadd.s32 1, %s12
    $region7: #{tpu_custom_call.1} parent=1 // loop_footer_branch
      %11 = sbr.rel target = $region3
    $region8: #{tpu_custom_call.1} parent=1 // loop_exit
      _
    %410 = vsyncpa [#allocation3], 1
    %s411 = scalar_lea.sflag [#allocation3], 1
    %412 = vsyncpa %s411, 1

</llo_original>
